<compile_context>
chip_gen: v7x
topology: tpu7x:2x2x1
jax: 0.10.0
libtpu: 0.0.40
codegen_flags: <defaults>
</compile_context>

<pallas_src>
import functools

import jax
import jax.numpy as jnp
from jax import lax
from jax.experimental import pallas as pl
from jax.experimental.pallas import tpu as pltpu


_VMEM_TILE_BUDGET = 32 * 1024 * 1024   # bytes for double-buffered in+out tiles
_VMEM_LIMIT_BYTES = 48 * 1024 * 1024   # scoped VMEM limit; safe on v7x (64 MiB phys)
_MAX_ROWS_TILE = 1024                  # diminishing returns beyond ~512-1024 rows


def _layernorm_kernel(x_ref, o_ref, *, d_model: int, eps: float):
    # x_ref block: (rows_tile, d_model); reduce over the last (lane) axis.
    x = x_ref[...].astype(jnp.float32)
    mu = jnp.mean(x, axis=-1, keepdims=True)
    centered = x - mu
    # unbiased variance == torch.std(dim=-1)**2 (correction=1 default)
    var = jnp.sum(centered * centered, axis=-1, keepdims=True) / (d_model - 1)
    inv = lax.rsqrt(var + eps)          # single EUP op, own VLIW slot
    o_ref[...] = (centered * inv).astype(o_ref.dtype)


def _choose_rows_tile(rows: int, d_model: int) -> int:
    # 2 arrays (in + out) x 2 pipeline buffers x f32 bytes per row.
    per_row_bytes = 4 * d_model * 4
    tile = _VMEM_TILE_BUDGET // per_row_bytes
    tile = min(tile, _MAX_ROWS_TILE, rows)
    tile = (tile // 16) * 16            # sublane-friendly for f32 and bf16 inputs
    return max(tile, 16)


def layer_normalisation(x: jax.Array, eps: float = 1e-6) -> jax.Array:
    """x: (batch, seq_len, d_model) -> same shape/dtype output."""
    batch, seq_len, d_model = x.shape
    rows = batch * seq_len
    x2 = x.reshape(rows, d_model)

    rows_tile = _choose_rows_tile(rows, d_model)
    rows_padded = pl.cdiv(rows, rows_tile) * rows_tile
    if rows_padded != rows:
        # Pad rows (never collapse to one giant block) so pipelining and
        # megacore row-sharding stay intact; padded rows are sliced off below.
        x2 = jnp.pad(x2, ((0, rows_padded - rows), (0, 0)))

    kernel = functools.partial(_layernorm_kernel, d_model=d_model, eps=eps)

    out2 = pl.pallas_call(
        kernel,
        out_shape=jax.ShapeDtypeStruct((rows_padded, d_model), x.dtype),
        grid_spec=pltpu.PrefetchScalarGridSpec(
            num_scalar_prefetch=0,
            grid=(rows_padded // rows_tile,),
            in_specs=[pl.BlockSpec((rows_tile, d_model), lambda i: (i, 0))],
            out_specs=pl.BlockSpec((rows_tile, d_model), lambda i: (i, 0)),
        ),
        compiler_params=pltpu.CompilerParams(
            dimension_semantics=("parallel",),
            vmem_limit_bytes=_VMEM_LIMIT_BYTES),
    )(x2)

    if rows_padded != rows:
        out2 = out2[:rows]
    return out2.reshape(batch, seq_len, d_model)


def _reference(x, eps):
    mu = jnp.mean(x, axis=-1, keepdims=True)
    d = x - mu
    var = jnp.sum(d * d, axis=-1, keepdims=True) / (x.shape[-1] - 1)
    return d / jnp.sqrt(var + eps)


if __name__ == "__main__":
    B, S, D = 2, 8, 32
    eps = 1e-6

    key = jax.random.PRNGKey(0)
    x = jax.random.normal(key, (B, S, D), dtype=jnp.float32)

    # deterministic parameter init matching nn.Module.__init__ (unused in forward)
    alpha = jnp.ones((D,), dtype=jnp.float32)
    bias = jnp.zeros((D,), dtype=jnp.float32)

    out = layer_normalisation(x, eps=eps)
    out = jax.block_until_ready(out)

    ref = _reference(x, eps)
    assert out.shape == (B, S, D)
    assert out.dtype == x.dtype
    assert jnp.allclose(out, ref, atol=1e-5, rtol=1e-5)

    print("KERNEL_OK")
</pallas_src>

<mosaic_0001>
module attributes {stable_mosaic.version = 11 : i64} {
  func.func @_layernorm_kernel(%arg0: i32, %arg1: memref<16x32xf32, #tpu.memory_space<vmem>>, %arg2: memref<16x32xf32, #tpu.memory_space<vmem>>) attributes {dimension_semantics = [#tpu.dimension_semantics<parallel>], iteration_bounds = array<i64: 1>, scalar_prefetch = 0 : i64, scratch_operands = 0 : i64, tpu.core_type = #tpu.core_type<tc>, window_params = [{transform_indices = @transform_0, window_bounds = array<i64: 16, 32>}, {transform_indices = @transform_1, window_bounds = array<i64: 16, 32>}]} {
    %c0 = arith.constant 0 : index
    %c0_0 = arith.constant 0 : index
    %0 = vector.load %arg1[%c0, %c0_0] : memref<16x32xf32, #tpu.memory_space<vmem>>, vector<16x32xf32>
    %cst = arith.constant dense<0.000000e+00> : vector<16xf32>
    %1 = vector.multi_reduction <add>, %0, %cst [1] : vector<16x32xf32> to vector<16xf32>
    %2 = vector.shape_cast %1 : vector<16xf32> to vector<16x1xf32>
    %cst_1 = arith.constant 3.200000e+01 : f32
    %3 = vector.broadcast %cst_1 : f32 to vector<16x1xf32>
    %4 = arith.divf %2, %3 : vector<16x1xf32>
    %5 = vector.broadcast %4 : vector<16x1xf32> to vector<16x32xf32>
    %6 = arith.subf %0, %5 : vector<16x32xf32>
    %7 = arith.mulf %6, %6 : vector<16x32xf32>
    %cst_2 = arith.constant dense<0.000000e+00> : vector<16xf32>
    %8 = vector.multi_reduction <add>, %7, %cst_2 [1] : vector<16x32xf32> to vector<16xf32>
    %9 = vector.shape_cast %8 : vector<16xf32> to vector<16x1xf32>
    %cst_3 = arith.constant 3.100000e+01 : f32
    %10 = vector.broadcast %cst_3 : f32 to vector<16x1xf32>
    %11 = arith.divf %9, %10 : vector<16x1xf32>
    %cst_4 = arith.constant 9.99999997E-7 : f32
    %12 = vector.broadcast %cst_4 : f32 to vector<16x1xf32>
    %13 = arith.addf %11, %12 : vector<16x1xf32>
    %14 = math.rsqrt %13 : vector<16x1xf32>
    %15 = vector.broadcast %14 : vector<16x1xf32> to vector<16x32xf32>
    %16 = arith.mulf %6, %15 : vector<16x32xf32>
    %c0_5 = arith.constant 0 : index
    %c0_6 = arith.constant 0 : index
    %17 = vector.load %arg2[%c0_5, %c0_6] : memref<16x32xf32, #tpu.memory_space<vmem>>, vector<16x32xf32>
    tpu.vector_store %arg2[%c0_5, %c0_6], %16 {strides = array<i32>} : memref<16x32xf32, #tpu.memory_space<vmem>>, vector<16x32xf32>,
    return
  }
  func.func @transform_0(%arg0: i32) -> (i32, i32) {
    %c0_i32 = arith.constant 0 : i32
    %c0_i32_0 = arith.constant 0 : i32
    return %arg0, %c0_i32 : i32, i32
  }
  func.func @transform_1(%arg0: i32) -> (i32, i32) {
    %c0_i32 = arith.constant 0 : i32
    %c0_i32_0 = arith.constant 0 : i32
    return %arg0, %c0_i32 : i32, i32
  }
}

</mosaic_0001>

<llo_original>
// kernel: tpu_custom_call.1
$region0: #{tpu_custom_call.1}
  #allocation0 [shape = 'u32[]', space=smem, size = 0x4, offset = 0x4, fixed_abs, tag = 'smem constant byte address 0x4 - core index']
  #allocation1 [shape = 'u32[144,128]{1,0:T(1,128)}', space=vmem, size = 0x12000, scoped, tag = 'internal scratch']
  %s0 = inlined_call_operand.hbm [shape: f32[16,32], index: 0, kind: input, shape index: {}]
  %s1 = inlined_call_operand.hbm [shape: f32[16,32], index: 1, kind: output, shape index: {}]
  %s2 = sld [smem:[#allocation0]]
  $region18: #{tpu_custom_call.1} parent=0
    _
  %s4 = ssub.s32 1, %s2
  %s5 = scalar_select 0, %s4, %s2
  $region1: #{tpu_custom_call.1} parent=0
    #allocation2 [shape = 'u8[8192]{0}', space=vmem, size = 0x2000, scoped, tag = 'input window, operand 0, single buffered']
    #allocation3 [shape = 's32[1]{0}', space=sflag, size = 0x4, scoped, tag = 'scoped memory for tpu_custom_call.1']
    #allocation4 [shape = 's32[1]{0}', space=sflag, size = 0x4, scoped, tag = 'scoped memory for tpu_custom_call.1']
    #allocation5 [shape = 'u8[8192]{0}', space=vmem, size = 0x2000, scoped, tag = 'output window, operand 0, single buffered']
    %6 = vsyncpa [#allocation3], 0
    %7 = vsyncpa [#allocation4], 0
    // Predicated region
    $region2: #{tpu_custom_call.1} parent=1 // pred_check
      _
    $region3: #{tpu_custom_call.1} parent=1 // pred_check_branch
      %9 = sbr.rel (0) target = $region5
    $region4: #{tpu_custom_call.1} parent=1 // pred_region
      %s11 = ssub.s32 256, 256
      %12 = vsyncadd [#allocation3], %s11
      %s13 = sshll.u32 [#allocation2], 4
      %s14 = int_to_ptr.vmem [resolvable:$true] %s13
      %19 = dma.hbm_to_vmem [thread:$0]  %s0, 256, %s14, [#allocation3], 128, 128, 8
    $region5: #{tpu_custom_call.1} parent=1 // pred_fallthru
      _
    // Predicated region
    $region6: #{tpu_custom_call.1} parent=1 // pred_check
      _
    $region7: #{tpu_custom_call.1} parent=1 // pred_check_branch
      %21 = sbr.rel (0) target = $region9
    $region8: #{tpu_custom_call.1} parent=1 // pred_region
      %22 = dma.done [#allocation3], 256
    $region9: #{tpu_custom_call.1} parent=1 // pred_fallthru
      _
    %v23 = vld [vmem:[#allocation2] sm:$0xff]
    %v24 = vld [vmem:[#allocation2 + $0x8] sm:$0xff]
    %vm25 = vcmask 261120
    %v26 = vsel %vm25, %v23, 0.0
    %27 = vadd.xlane.f32.xlu0 %v26
    %v28 = vpop.xlane.xlu0 %27
    %v29 = vsel %vm25, %v24, 0.0
    %30 = vadd.xlane.f32.xlu0 %v29
    %v31 = vpop.xlane.xlu0 %30
    %v32 = vrcp.pop 32.0
    %v33 = vmul.f32 %v28, %v32
    %v34 = vmul.f32 %v31, %v32
    %v35 = vsub.f32 %v23, %v33
    %v36 = vsub.f32 %v24, %v34
    %v37 = vmul.f32 %v35, %v35
    %v38 = vmul.f32 %v36, %v36
    %v39 = vsel %vm25, %v37, 0.0
    %40 = vadd.xlane.f32.xlu0 %v39
    %v41 = vpop.xlane.xlu0 %40
    %v42 = vsel %vm25, %v38, 0.0
    %43 = vadd.xlane.f32.xlu0 %v42
    %v44 = vpop.xlane.xlu0 %43
    %v45 = vrcp.pop 31.0
    %v46 = vmul.f32 %v41, %v45
    %v47 = vmul.f32 %v44, %v45
    %v48 = vadd.f32 %v46, 1e-06
    %v49 = vadd.f32 %v47, 1e-06
    %v50 = vrsqrt.pop %v48
    %v51 = vrsqrt.pop %v49
    %v52 = vmul.f32 %v35, %v50
    %v53 = vmul.f32 %v36, %v51
    %54 = vst.msk [vmem:[#allocation5] sm:$0xff] %vm25, %v52
    %55 = vst.msk [vmem:[#allocation5 + $0x8] sm:$0xff] %vm25, %v53
    // Predicated region
    $region10: #{tpu_custom_call.1} parent=1 // pred_check
      _
    $region11: #{tpu_custom_call.1} parent=1 // pred_check_branch
      %57 = sbr.rel (0) target = $region13
    $region12: #{tpu_custom_call.1} parent=1 // pred_region
      %s59 = ssub.s32 256, 256
      %60 = vsyncadd [#allocation4], %s59
      %s61 = sshll.u32 [#allocation5], 4
      %s62 = int_to_ptr.vmem [resolvable:$true] %s61
      %67 = dma.vmem_to_hbm [thread:$0]  %s62, 256, %s1, [#allocation4], 128, 128, 8
    $region13: #{tpu_custom_call.1} parent=1 // pred_fallthru
      _
    // Predicated region
    $region14: #{tpu_custom_call.1} parent=1 // pred_check
      _
    $region15: #{tpu_custom_call.1} parent=1 // pred_check_branch
      %69 = sbr.rel (0) target = $region17
    $region16: #{tpu_custom_call.1} parent=1 // pred_region
      %70 = dma.done [#allocation4], 256
    $region17: #{tpu_custom_call.1} parent=1 // pred_fallthru
      _
    %71 = vsyncpa [#allocation3], 1
    %72 = vsyncpa [#allocation4], 1

</llo_original>
